<compile_context>
chip_gen: v7x
topology: tpu7x:2x2x1
jax: 0.10.0
libtpu: 0.0.40
codegen_flags: <defaults>
</compile_context>

<pallas_src>
import jax
import jax.numpy as jnp
from jax.experimental import pallas as pl
from jax.experimental.pallas import tpu as pltpu

DATASET_CONFIG = {
    'svhn': ([0.4376821, 0.4437697, 0.47280442],
             [0.19803012, 0.20101562, 0.19703614], 32, 10),
    'cifar10': ([0.49139968, 0.48215841, 0.44653091],
                [0.24703223, 0.24348513, 0.26158784], 32, 10),
    'imagenet100': ([0.485, 0.456, 0.406],
                    [0.229, 0.224, 0.225], 224, 100),
}


def _cdiv(a, b):
    return -(-a // b)


def get_dataset_params(dataset):
    """(1, C, R, R) constant planes, exactly like the torch helper (used for the
    reference check; the kernel itself only needs the per-channel scalars)."""
    mean, std, resol, _ = DATASET_CONFIG[dataset]
    mean_arr = jnp.stack(
        [jnp.full((resol, resol), m, jnp.float32) for m in mean])[None]
    std_arr = jnp.stack(
        [jnp.full((resol, resol), s, jnp.float32) for s in std])[None]
    return mean_arr, std_arr


def _tpu_generation_params():
    """Generation-aware tiling knobs.

    v5e / v6e: 1 TensorCore, 128 MiB physical VMEM -> big tiles, no megacore
    split.  v7x / unknown / megacore chips: assume 2 TCs and the smaller
    64 MiB/TC VMEM -> smaller tiles, guarantee >= 4 parallel blocks.
    """
    try:
        kind = jax.devices()[0].device_kind.lower()
    except Exception:
        kind = ""
    single_core = any(tag in kind for tag in
                      ("v5 lite", "v5e", "v5lite", "v6 lite", "v6e", "v6lite"))
    if single_core:
        return dict(num_tc=1,
                    target_tile_bytes=12 * 1024 * 1024,   # f32 live ~ 2*(12+12)=48 MiB
                    vmem_limit_bytes=80 * 1024 * 1024)    # << 128 MiB physical
    return dict(num_tc=2,
                target_tile_bytes=6 * 1024 * 1024,        # live ~ 2*(6+6)=24 MiB / TC
                vmem_limit_bytes=48 * 1024 * 1024)        # < 64 MiB physical / TC


def _choose_tiling(rows, cols, in_itemsize, out_itemsize, num_tc, target_tile_bytes):
    """Pick (block_rows, block_cols, nr, nc) for the (rows, cols) slab."""
    # dtype-dependent sublane multiple (8 for 4B, 16 for 2B, 32 for 1B); the
    # block must satisfy both the input and the output dtype tilings.
    sub = max(8, 32 // max(1, min(in_itemsize, out_itemsize)))

    bytes_per_row = max(1, cols * in_itemsize)
    br = max(1, target_tile_bytes // bytes_per_row)
    if br >= rows or rows <= sub:
        block_rows = rows
    else:
        block_rows = max(sub, (br // sub) * sub)
    nr = _cdiv(rows, block_rows)

    block_cols = cols
    if num_tc >= 2 and nr < 4 and cols >= 2 * 128:
        # Guarantee >= 4 'parallel' blocks so both TensorCores are engaged and
        # each still double-buffers.  Column blocks stay multiples of 128 so
        # stores remain lane-dense / unmasked.
        nc_target = _cdiv(4, nr)
        block_cols = max(128, ((cols // nc_target) // 128) * 128)
    nc = _cdiv(cols, block_cols)
    return block_rows, block_cols, nr, nc


def dataset_transform(x, mean_c, std_c):
    """x: (N, C, H, W) pixels in [0, 255]; mean_c/std_c: (C,) per-channel stats.

    Returns (x/255 - mean)/std; float output (same dtype as x if x is floating,
    else float32 so integer pixel inputs are not silently truncated).
    """
    N, C, H, W = x.shape
    rows, cols = N * C, H * W

    out_dtype = x.dtype if jnp.issubdtype(x.dtype, jnp.floating) else jnp.float32
    # TODO(synk): if the surrounding pipeline allows, feed uint8 pixels and/or
    # emit bf16 output to cut HBM bytes (this kernel is purely bandwidth-bound).

    mean_c = mean_c.astype(jnp.float32)
    std_c = std_c.astype(jnp.float32)
    # Fold normalization into a single FMA (~1-ulp difference vs explicit div).
    scale_c = 1.0 / (255.0 * std_c)          # (C,)
    bias_c = -mean_c / std_c                 # (C,)

    gen = _tpu_generation_params()
    in_item = jnp.dtype(x.dtype).itemsize
    out_item = jnp.dtype(out_dtype).itemsize
    block_rows, block_cols, nr, nc = _choose_tiling(
        rows, cols, in_item, out_item, gen["num_tc"], gen["target_tile_bytes"])

    # Per-row constants for the flattened (rows, cols) layout: row = n*C + c.
    # Padded to nr*block_rows so in-kernel pl.ds slices never go out of bounds.
    rows_padded = nr * block_rows
    scale_rows = jnp.tile(scale_c, N)
    bias_rows = jnp.tile(bias_c, N)
    pad = rows_padded - rows
    if pad:
        scale_rows = jnp.pad(scale_rows, (0, pad))
        bias_rows = jnp.pad(bias_rows, (0, pad))
    scale_rows = scale_rows.reshape(rows_padded, 1)
    bias_rows = bias_rows.reshape(rows_padded, 1)

    x2 = x.reshape(rows, cols)               # lane-dense: last dim = H*W

    def kernel(x_ref, scale_ref, bias_ref, o_ref):
        # scale/bias are resident (constant index_map): slice this row-block.
        if nr == 1:
            s = scale_ref[...]
            b = bias_ref[...]
        else:
            start = pl.multiple_of(pl.program_id(0) * block_rows, block_rows)
            s = scale_ref[pl.ds(start, block_rows), :]
            b = bias_ref[pl.ds(start, block_rows), :]
        xv = x_ref[...].astype(jnp.float32)
        o_ref[...] = (xv * s + b).astype(o_ref.dtype)

    x_spec = pl.BlockSpec((block_rows, block_cols), lambda i, j: (i, j))
    const_spec = pl.BlockSpec((rows_padded, 1), lambda i, j: (0, 0))
    out_spec = pl.BlockSpec((block_rows, block_cols), lambda i, j: (i, j))

    cost = pl.CostEstimate(
        flops=2 * rows * cols,
        transcendentals=0,
        bytes_accessed=rows * cols * (in_item + out_item),
    )

    out2 = pl.pallas_call(
        kernel,
        out_shape=jax.ShapeDtypeStruct((rows, cols), out_dtype),
        grid=(nr, nc),
        in_specs=[x_spec, const_spec, const_spec],
        out_specs=out_spec,
        compiler_params=pltpu.CompilerParams(
            dimension_semantics=("parallel", "parallel"),
            vmem_limit_bytes=gen["vmem_limit_bytes"],
        ),
        cost_estimate=cost,
    )(x2, scale_rows, bias_rows)

    return out2.reshape(N, C, H, W)


class DatasetTransform:
    def __init__(self, dataset):
        mean, std, _, _ = DATASET_CONFIG[dataset]
        self.mean_c = jnp.asarray(mean, jnp.float32)
        self.std_c = jnp.asarray(std, jnp.float32)
        # Full planes kept only to mirror the torch module / reference check.
        self.mean, self.std = get_dataset_params(dataset)

    def __call__(self, x):
        return dataset_transform(x, self.mean_c, self.std_c)


if __name__ == "__main__":
    key = jax.random.PRNGKey(0)
    dataset = "cifar10"  # resol = 32, 3 channels (matches the module's config)
    N, C, R = 2, 3, DATASET_CONFIG[dataset][2]

    # Pixels in [0, 255], as the module expects.
    x = jax.random.uniform(key, (N, C, R, R), jnp.float32, minval=0.0, maxval=255.0)

    mod = DatasetTransform(dataset)
    out = mod(x)
    out = jax.block_until_ready(out)

    # Pure-JAX reference check against the original (x/255 - mean)/std formulation.
    ref = (x / 255.0 - mod.mean) / mod.std
    assert out.shape == (N, C, R, R)
    assert out.dtype == jnp.float32
    assert jnp.allclose(out, ref, atol=1e-5, rtol=1e-5)

    print("KERNEL_OK")
</pallas_src>

<mosaic_0001>
module attributes {stable_mosaic.version = 11 : i64} {
  func.func @kernel(%arg0: i32, %arg1: i32, %arg2: memref<6x256xf32, #tpu.memory_space<vmem>>, %arg3: memref<6x1xf32, #tpu.memory_space<vmem>>, %arg4: memref<6x1xf32, #tpu.memory_space<vmem>>, %arg5: memref<6x256xf32, #tpu.memory_space<vmem>>) attributes {dimension_semantics = [#tpu.dimension_semantics<parallel>, #tpu.dimension_semantics<parallel>], iteration_bounds = array<i64: 1, 4>, scalar_prefetch = 0 : i64, scratch_operands = 0 : i64, tpu.core_type = #tpu.core_type<tc>, window_params = [{transform_indices = @transform_0, window_bounds = array<i64: 6, 256>}, {pipeline_mode = #tpu.pipeline_mode<synchronous>, transform_indices = @transform_1, window_bounds = array<i64: 6, 1>}, {pipeline_mode = #tpu.pipeline_mode<synchronous>, transform_indices = @transform_2, window_bounds = array<i64: 6, 1>}, {transform_indices = @transform_3, window_bounds = array<i64: 6, 256>}]} {
    %c0 = arith.constant 0 : index
    %c0_0 = arith.constant 0 : index
    %0 = vector.load %arg3[%c0, %c0_0] : memref<6x1xf32, #tpu.memory_space<vmem>>, vector<6x1xf32>
    %c0_1 = arith.constant 0 : index
    %c0_2 = arith.constant 0 : index
    %1 = vector.load %arg4[%c0_1, %c0_2] : memref<6x1xf32, #tpu.memory_space<vmem>>, vector<6x1xf32>
    %c0_3 = arith.constant 0 : index
    %c0_4 = arith.constant 0 : index
    %2 = vector.load %arg2[%c0_3, %c0_4] : memref<6x256xf32, #tpu.memory_space<vmem>>, vector<6x256xf32>
    %3 = vector.broadcast %0 : vector<6x1xf32> to vector<6x256xf32>
    %4 = arith.mulf %2, %3 : vector<6x256xf32>
    %5 = vector.broadcast %1 : vector<6x1xf32> to vector<6x256xf32>
    %6 = arith.addf %4, %5 : vector<6x256xf32>
    %c0_5 = arith.constant 0 : index
    %c0_6 = arith.constant 0 : index
    %7 = vector.load %arg5[%c0_5, %c0_6] : memref<6x256xf32, #tpu.memory_space<vmem>>, vector<6x256xf32>
    tpu.vector_store %arg5[%c0_5, %c0_6], %6 {strides = array<i32>} : memref<6x256xf32, #tpu.memory_space<vmem>>, vector<6x256xf32>,
    return
  }
  func.func @transform_0(%arg0: i32, %arg1: i32) -> (i32, i32) {
    %c0_i32 = arith.constant 0 : i32
    return %arg0, %arg1 : i32, i32
  }
  func.func @transform_1(%arg0: i32, %arg1: i32) -> (i32, i32) {
    %c0_i32 = arith.constant 0 : i32
    %c0_i32_0 = arith.constant 0 : i32
    %c0_i32_1 = arith.constant 0 : i32
    return %c0_i32, %c0_i32_0 : i32, i32
  }
  func.func @transform_2(%arg0: i32, %arg1: i32) -> (i32, i32) {
    %c0_i32 = arith.constant 0 : i32
    %c0_i32_0 = arith.constant 0 : i32
    %c0_i32_1 = arith.constant 0 : i32
    return %c0_i32, %c0_i32_0 : i32, i32
  }
  func.func @transform_3(%arg0: i32, %arg1: i32) -> (i32, i32) {
    %c0_i32 = arith.constant 0 : i32
    return %arg0, %arg1 : i32, i32
  }
}

</mosaic_0001>

<llo_original>
// kernel: tpu_custom_call.1
$region0: #{tpu_custom_call.1}
  #allocation0 [shape = 'u32[]', space=smem, size = 0x4, offset = 0x4, fixed_abs, tag = 'smem constant byte address 0x4 - core index']
  #allocation1 [shape = 'u32[144,128]{1,0:T(1,128)}', space=vmem, size = 0x12000, scoped, tag = 'internal scratch']
  %s0 = inlined_call_operand.hbm [shape: f32[6,1024], index: 0, kind: input, shape index: {}]
  %s1 = inlined_call_operand.vmem [shape: f32[6,1], index: 1, kind: input, shape index: {}]
  %s2 = inlined_call_operand.vmem [shape: f32[6,1], index: 2, kind: input, shape index: {}]
  %s3 = inlined_call_operand.hbm [shape: f32[6,1024], index: 3, kind: output, shape index: {}]
  %s4 = sld [smem:[#allocation0]]
  $region49: #{tpu_custom_call.1} parent=0
    _
  %s6 = ssub.s32 1, %s4
  %s7 = scalar_select 0, %s6, %s4
  $region1: #{tpu_custom_call.1} parent=0
    #allocation2 [shape = 'u8[16384]{0}', space=vmem, size = 0x4000, scoped, tag = 'input window, operand 0']
    #allocation3 [shape = 's32[2]{0}', space=sflag, size = 0x8, scoped, tag = 'scoped memory for tpu_custom_call.1']
    #allocation4 [shape = 's32[2]{0}', space=sflag, size = 0x8, scoped, tag = 'scoped memory for tpu_custom_call.1']
    #allocation5 [shape = 'u8[16384]{0}', space=vmem, size = 0x4000, scoped, tag = 'output window, operand 0']
    %8 = vsyncpa [#allocation3], 0
    %s9 = scalar_lea.sflag [#allocation3], 1
    %10 = vsyncpa %s9, 0
    %11 = vsyncpa [#allocation4], 0
    %s12 = scalar_lea.sflag [#allocation4], 1
    %13 = vsyncpa %s12, 0
    loop: start=0, step=1, limit=6
    $region2: #{tpu_custom_call.1} parent=1 // loop_pre_header
      _
    $region3: #{tpu_custom_call.1} parent=1 // loop_header
      %s15 = sphi 0, %s19
      %p16 = scmp.ge.s32.totalorder %s15, 6
      %s22 = sphi 0, %s34
      %s23 = sphi 0, %s30
      %s24 = sphi 0, %s22
      %s25 = sphi 0, %s23
      %s26 = sphi 0, %s24
      %s27 = sphi 0, %s25
      %s39 = sphi 0, %s41
      %s42 = sphi 0, %s39
      %s43 = sphi 0, %s42
      %s59 = sphi 0, %s43
      %s63 = sphi 0, %s63
      %s65 = sphi 0, %s63
      %s66 = sphi 0, %s65
      %s80 = sphi 0, %s66
      %s84 = sphi 0, %s84
      %s86 = sphi 0, %s84
      %s87 = sphi 0, %s86
      %s101 = sphi 0, %s87
      %s109 = sphi 0, %s111
      %s112 = sphi 0, %s109
      %s113 = sphi 0, %s112
      %s129 = sphi 0, %s113
    $region4: #{tpu_custom_call.1} parent=1 // loop_header_branch
      %18 = sbr.rel (%p16) target = $region8
    $region5: #{tpu_custom_call.1} parent=1 // loop_body
      %s20 = ssub.s32 %s15, 1
      %s21 = ssub.s32 %s15, 2
      %s28 = sadd.s32 1, %s23
      %p29 = scmp.ge.s32.totalorder %s28, 4
      %s30 = scalar_select %p29, 0, %s28
      %s31 = sadd.s32 1, %s22
      %s32 = scalar_select %p29, %s31, %s22
      %p33 = scmp.ge.s32.totalorder %s32, 1
      %s34 = scalar_select %p33, 0, %s32
      %s35 = ssub.s32 %s22, %s34
      %s36 = ssub.s32 %s23, %s30
      %s37 = sor.u32 %s35, %s36
      %p38 = scmp.eq.s32.totalorder %s37, 0
      %s40 = sadd.s32 %s39, 1
      %s41 = scalar_select %p38, %s39, %s40
      %p44 = pneg %p38
      %p45 = scmp.eq.s32.totalorder %s15, 3
      %p46 = por %p44, %p45
      %p47 = scmp.ne.s32.totalorder %s39, %s42
      %p48 = scmp.eq.s32.totalorder %s15, 0
      %p49 = por %p47, %p48
      %p50 = scmp.ne.s32.totalorder %s39, %s42
      %p51 = scmp.eq.s32.totalorder %s20, 3
      %p52 = por %p50, %p51
      %p53 = scmp.ne.s32.totalorder %s42, %s43
      %p54 = scmp.eq.s32.totalorder %s20, 0
      %p55 = por %p53, %p54
      %p56 = scmp.ne.s32.totalorder %s42, %s43
      %p57 = scmp.eq.s32.totalorder %s21, 3
      %p58 = por %p56, %p57
      %p60 = scmp.ne.s32.totalorder %s43, %s59
      %p61 = scmp.eq.s32.totalorder %s21, 0
      %p62 = por %p60, %p61
      %s64 = sadd.s32 %s63, 1
      %p67 = scmp.eq.s32.totalorder %s15, 3
      %p68 = scmp.ne.s32.totalorder %s63, %s65
      %p69 = scmp.eq.s32.totalorder %s15, 0
      %p70 = por %p68, %p69
      %p71 = scmp.ne.s32.totalorder %s63, %s65
      %p72 = scmp.eq.s32.totalorder %s20, 3
      %p73 = por %p71, %p72
      %p74 = scmp.ne.s32.totalorder %s65, %s66
      %p75 = scmp.eq.s32.totalorder %s20, 0
      %p76 = por %p74, %p75
      %p77 = scmp.ne.s32.totalorder %s65, %s66
      %p78 = scmp.eq.s32.totalorder %s21, 3
      %p79 = por %p77, %p78
      %p81 = scmp.ne.s32.totalorder %s66, %s80
      %p82 = scmp.eq.s32.totalorder %s21, 0
      %p83 = por %p81, %p82
      %s85 = sadd.s32 %s84, 1
      %p88 = scmp.eq.s32.totalorder %s15, 3
      %p89 = scmp.ne.s32.totalorder %s84, %s86
      %p90 = scmp.eq.s32.totalorder %s15, 0
      %p91 = por %p89, %p90
      %p92 = scmp.ne.s32.totalorder %s84, %s86
      %p93 = scmp.eq.s32.totalorder %s20, 3
      %p94 = por %p92, %p93
      %p95 = scmp.ne.s32.totalorder %s86, %s87
      %p96 = scmp.eq.s32.totalorder %s20, 0
      %p97 = por %p95, %p96
      %p98 = scmp.ne.s32.totalorder %s86, %s87
      %p99 = scmp.eq.s32.totalorder %s21, 3
      %p100 = por %p98, %p99
      %p102 = scmp.ne.s32.totalorder %s87, %s101
      %p103 = scmp.eq.s32.totalorder %s21, 0
      %p104 = por %p102, %p103
      %s105 = ssub.s32 %s22, %s34
      %s106 = ssub.s32 %s23, %s30
      %s107 = sor.u32 %s105, %s106
      %p108 = scmp.eq.s32.totalorder %s107, 0
      %s110 = sadd.s32 %s109, 1
      %s111 = scalar_select %p108, %s109, %s110
      %p114 = pneg %p108
      %p115 = scmp.eq.s32.totalorder %s15, 3
      %p116 = por %p114, %p115
      %p117 = scmp.ne.s32.totalorder %s109, %s112
      %p118 = scmp.eq.s32.totalorder %s15, 0
      %p119 = por %p117, %p118
      %p120 = scmp.ne.s32.totalorder %s109, %s112
      %p121 = scmp.eq.s32.totalorder %s20, 3
      %p122 = por %p120, %p121
      %p123 = scmp.ne.s32.totalorder %s112, %s113
      %p124 = scmp.eq.s32.totalorder %s20, 0
      %p125 = por %p123, %p124
      %p126 = scmp.ne.s32.totalorder %s112, %s113
      %p127 = scmp.eq.s32.totalorder %s21, 3
      %p128 = por %p126, %p127
      %p130 = scmp.ne.s32.totalorder %s113, %s129
      %p131 = scmp.eq.s32.totalorder %s21, 0
      %p132 = por %p130, %p131
      %p133 = scmp.le.s32.totalorder 1, %s15
      %p134 = scmp.lt.s32.totalorder %s15, 5
      %p135 = pnand %p133, %p134
      %p136 = pneg %p135
      // Predicated region
      $region9: #{tpu_custom_call.1} parent=5 // pred_check
        _
      $region10: #{tpu_custom_call.1} parent=5 // pred_check_branch
        %138 = sbr.rel (%p135) target = $region12
      $region11: #{tpu_custom_call.1} parent=5 // pred_region
        %s139 = ssub.s32 %s15, 1
        // Predicated region
        $region13: #{tpu_custom_call.1} parent=11 // pred_check
          %p140 = pneg %p76
        $region14: #{tpu_custom_call.1} parent=11 // pred_check_branch
          %142 = sbr.rel (%p140) target = $region16
        $region15: #{tpu_custom_call.1} parent=11 // pred_region
          _
        $region16: #{tpu_custom_call.1} parent=11 // pred_fallthru
          _
        // Predicated region
        $region17: #{tpu_custom_call.1} parent=11 // pred_check
          %p143 = pneg %p97
        $region18: #{tpu_custom_call.1} parent=11 // pred_check_branch
          %145 = sbr.rel (%p143) target = $region20
        $region19: #{tpu_custom_call.1} parent=11 // pred_region
          _
        $region20: #{tpu_custom_call.1} parent=11 // pred_fallthru
          _
      $region12: #{tpu_custom_call.1} parent=5 // pred_fallthru
        _
      %p146 = scmp.lt.s32.totalorder %s15, 4
      // Predicated region
      $region21: #{tpu_custom_call.1} parent=5 // pred_check
        %p147 = pneg %p146
      $region22: #{tpu_custom_call.1} parent=5 // pred_check_branch
        %149 = sbr.rel (%p147) target = $region24
      $region23: #{tpu_custom_call.1} parent=5 // pred_region
        // Predicated region
        $region25: #{tpu_custom_call.1} parent=23 // pred_check
          %p150 = pneg %p49
        $region26: #{tpu_custom_call.1} parent=23 // pred_check_branch
          %152 = sbr.rel (%p150) target = $region28
        $region27: #{tpu_custom_call.1} parent=23 // pred_region
          %s153 = sand.u32 %s39, 1
          %s154 = scalar_lea.sflag [#allocation3], %s153
          %s155 = sand.u32 %s39, 1
          %s156 = smul.addr %s155, 16
          %s157 = scalar_lea.vmem [#allocation2], %s156
          %s158 = smul.u32 2, %s23
          %s160 = ssub.s32 256, 256
          %161 = vsyncadd %s154, %s160
          %s162 = smul.addr %s22, 8
          %s163 = sadd.s32 %s158, %s162
          %s164 = smul.addr %s163, 128
          %s165 = scalar_lea.hbm %s0, %s164
          %s167 = sshll.u32 %s157, 4
          %s168 = int_to_ptr.vmem [resolvable:$true] %s167
          %170 = dma.hbm_to_vmem [thread:$0]  %s165, 256, %s168, %s154
        $region28: #{tpu_custom_call.1} parent=23 // pred_fallthru
          _
      $region24: #{tpu_custom_call.1} parent=5 // pred_fallthru
        _
      %p171 = scmp.le.s32.totalorder 1, %s15
      %p172 = scmp.lt.s32.totalorder %s15, 5
      %p173 = pnand %p171, %p172
      %p174 = pneg %p173
      // Predicated region
      $region29: #{tpu_custom_call.1} parent=5 // pred_check
        _
      $region30: #{tpu_custom_call.1} parent=5 // pred_check_branch
        %176 = sbr.rel (%p173) target = $region32
      $region31: #{tpu_custom_call.1} parent=5 // pred_region
        %s177 = ssub.s32 %s15, 1
        %s178 = sand.u32 %s42, 1
        %s179 = scalar_lea.sflag [#allocation3], %s178
        %s180 = sand.u32 %s42, 1
        %s181 = smul.addr %s180, 16
        %s182 = scalar_lea.vmem [#allocation2], %s181
        // Predicated region
        $region33: #{tpu_custom_call.1} parent=31 // pred_check
          %p183 = pneg %p55
        $region34: #{tpu_custom_call.1} parent=31 // pred_check_branch
          %185 = sbr.rel (%p183) target = $region36
        $region35: #{tpu_custom_call.1} parent=31 // pred_region
          %186 = dma.done %s179, 256
        $region36: #{tpu_custom_call.1} parent=31 // pred_fallthru
          _
        %s187 = sand.u32 %s42, 1
        %s188 = scalar_lea.sflag [#allocation3], %s187
        %s189 = sand.u32 %s42, 1
        %s190 = smul.addr %s189, 16
        %s191 = scalar_lea.vmem [#allocation2], %s190
        %p192 = pneg %p55
        %p193 = pneg %p52
        %p194 = pneg %p76
        %p195 = pneg %p73
        %p196 = pneg %p97
        %p197 = pneg %p94
        %p198 = pneg %p125
        %p199 = pneg %p122
        %s200 = sand.u32 %s112, 1
        %s201 = scalar_lea.sflag [#allocation4], %s200
        %s202 = sand.u32 %s112, 1
        %s203 = smul.addr %s202, 16
        %s204 = scalar_lea.vmem [#allocation5], %s203
        %s205 = smul.u32 2, %s25
        %s206 = smul.u32 2, %s25
        %v207 = vld [vmem:[%s1] sm:$0x3f]
        %v208 = vld [vmem:[%s2] sm:$0x3f]
        %v209 = vld [vmem:[%s182] sm:$0x3f]
        %v210 = vld [vmem:[%s182 + $0x8] sm:$0x3f]
        %212 = vset.pattern.permute.xlu0 0
        %213 = vperm.xlu0 %212, %v207
        %v214 = vpop.permute.xlu0 %213
        %v216 = vmul.f32 %v209, %v214
        %v217 = vmul.f32 %v210, %v214
        %219 = vset.pattern.permute.xlu0 0
        %220 = vperm.xlu0 %219, %v208
        %v221 = vpop.permute.xlu0 %220
        %v223 = vadd.f32 %v216, %v221
        %v224 = vadd.f32 %v217, %v221
        %225 = vst [vmem:[%s204] sm:$0x3f] %v223
        %226 = vst [vmem:[%s204 + $0x8] sm:$0x3f] %v224
        %s227 = sand.u32 %s112, 1
        %s228 = scalar_lea.sflag [#allocation4], %s227
        %s229 = sand.u32 %s112, 1
        %s230 = smul.addr %s229, 16
        %s231 = scalar_lea.vmem [#allocation5], %s230
        // Predicated region
        $region37: #{tpu_custom_call.1} parent=31 // pred_check
          %p232 = pneg %p122
        $region38: #{tpu_custom_call.1} parent=31 // pred_check_branch
          %234 = sbr.rel (%p232) target = $region40
        $region39: #{tpu_custom_call.1} parent=31 // pred_region
          %s235 = smul.u32 2, %s25
          %s237 = ssub.s32 256, 256
          %238 = vsyncadd %s228, %s237
          %s239 = smul.addr %s24, 8
          %s240 = sadd.s32 %s235, %s239
          %s241 = smul.addr %s240, 128
          %s242 = scalar_lea.hbm %s3, %s241
          %s244 = sshll.u32 %s231, 4
          %s245 = int_to_ptr.vmem [resolvable:$true] %s244
          %247 = dma.vmem_to_hbm [thread:$0]  %s245, 256, %s242, %s228
        $region40: #{tpu_custom_call.1} parent=31 // pred_fallthru
          _
      $region32: #{tpu_custom_call.1} parent=5 // pred_fallthru
        _
      %p248 = scmp.le.s32.totalorder 2, %s15
      // Predicated region
      $region41: #{tpu_custom_call.1} parent=5 // pred_check
        %p249 = pneg %p248
      $region42: #{tpu_custom_call.1} parent=5 // pred_check_branch
        %251 = sbr.rel (%p249) target = $region44
      $region43: #{tpu_custom_call.1} parent=5 // pred_region
        %s252 = ssub.s32 %s15, 2
        // Predicated region
        $region45: #{tpu_custom_call.1} parent=43 // pred_check
          %p253 = pneg %p128
        $region46: #{tpu_custom_call.1} parent=43 // pred_check_branch
          %255 = sbr.rel (%p253) target = $region48
        $region47: #{tpu_custom_call.1} parent=43 // pred_region
          %s256 = sand.u32 %s113, 1
          %s257 = scalar_lea.sflag [#allocation4], %s256
          %s258 = sand.u32 %s113, 1
          %s259 = smul.addr %s258, 16
          %s260 = scalar_lea.vmem [#allocation5], %s259
          %261 = dma.done %s257, 256
        $region48: #{tpu_custom_call.1} parent=43 // pred_fallthru
          _
      $region44: #{tpu_custom_call.1} parent=5 // pred_fallthru
        _
    $region6: #{tpu_custom_call.1} parent=1 // loop_footer
      %s19 = sadd.s32 1, %s15
    $region7: #{tpu_custom_call.1} parent=1 // loop_footer_branch
      %14 = sbr.rel target = $region3
    $region8: #{tpu_custom_call.1} parent=1 // loop_exit
      _
    %262 = vsyncpa [#allocation3], 1
    %s263 = scalar_lea.sflag [#allocation3], 1
    %264 = vsyncpa %s263, 1
    %265 = vsyncpa [#allocation4], 1
    %s266 = scalar_lea.sflag [#allocation4], 1
    %267 = vsyncpa %s266, 1

</llo_original>
